<compile_context>
chip_gen: v5e
topology: v5e:2x2
jax: 0.10.0
libtpu: 0.0.40
codegen_flags: <defaults>
</compile_context>

<pallas_src>
import jax
import jax.numpy as jnp
from jax.experimental import pallas as pl
from jax.experimental.pallas import tpu as pltpu


def _round_up(x, m):
    return (x + m - 1) // m * m


def _pad_to(arr, shape):
    pads = [(0, t - s) for s, t in zip(arr.shape, shape)]
    if any(p[1] for p in pads):
        return jnp.pad(arr, pads)
    return arr


def _multiblock_kernel(x_ref, w1_ref, b1_ref, w2_ref, b2_ref, o_ref,
                       res_ref, acc_ref):
    """One (row_tile, layer, ff_tile) grid step of the fused layer stack.

    res_ref : f32 (TILE_N, H) resident activation for this row tile
    acc_ref : f32 (TILE_N, H) accumulator for the second matmul (over FF tiles)
    """
    layer = pl.program_id(1)
    ff = pl.program_id(2)
    n_layers = pl.num_programs(1)
    n_ff = pl.num_programs(2)

    # Load the activation row-tile once per row tile (start of layer stack).
    @pl.when(jnp.logical_and(layer == 0, ff == 0))
    def _():
        res_ref[...] = x_ref[...].astype(jnp.float32)

    # Start of each layer's FF reduction: zero the accumulator.
    @pl.when(ff == 0)
    def _():
        acc_ref[...] = jnp.zeros_like(acc_ref)

    # First matmul (bf16 operands -> f32 acc), bias, approximate GELU.
    x_bf16 = res_ref[...].astype(jnp.bfloat16)
    h = jnp.dot(x_bf16, w1_ref[...], preferred_element_type=jnp.float32)
    h = h + b1_ref[...]                       # (1, TILE_FF) broadcast over rows
    h = jax.nn.gelu(h, approximate=True)

    # Second matmul: accumulate the FF-tile partial product in f32.
    acc_ref[...] += jnp.dot(h.astype(jnp.bfloat16), w2_ref[...],
                            preferred_element_type=jnp.float32)

    # End of this layer's FF reduction: residual add + output bias (f32).
    @pl.when(ff == n_ff - 1)
    def _():
        res_ref[...] = res_ref[...] + acc_ref[...] + b2_ref[...]

    # End of the whole layer stack for this row tile: write the output slab.
    @pl.when(jnp.logical_and(layer == n_layers - 1, ff == n_ff - 1))
    def _():
        o_ref[...] = res_ref[...].astype(o_ref.dtype)


def wrapper_multiblock_forward(x, layer_params, *, tile_n=256, tile_ff=512):
    """Pallas analogue of WrapperMultiblock.forward.

    x: (B, S, H) float32.  layer_params: list of (w1 bf16, b1 f32, w2 bf16,
    b2 f32) tuples.  The sequential layer application (and the HF 1-tuple
    unwrap the PyTorch wrapper performs) is realized by the sequential layer
    grid axis inside the single fused kernel.
    """
    b, s, h = x.shape
    n = b * s
    num_layers = len(layer_params)
    ff = layer_params[0][0].shape[1]

    # Lane/sublane-dense padding, tiles sized per the TPU MXU/VMEM budget
    # (defaults fit v7x's 64 MiB VMEM with headroom for H up to ~4096).
    h_pad = _round_up(h, 128)
    n_pad = _round_up(n, 8)
    tile_n = min(tile_n, n_pad)
    n_pad = _round_up(n_pad, tile_n)
    ff_pad = _round_up(ff, 128)
    tile_ff = min(tile_ff, ff_pad)
    ff_pad = _round_up(ff_pad, tile_ff)

    # Stack + zero-pad parameters: (L, H, FF), (L, 1, FF), (L, FF, H), (L, 1, H).
    w1_s = jnp.stack([_pad_to(p[0].astype(jnp.bfloat16), (h_pad, ff_pad))
                      for p in layer_params])
    b1_s = jnp.stack([_pad_to(p[1].reshape(1, -1).astype(jnp.float32), (1, ff_pad))
                      for p in layer_params])
    w2_s = jnp.stack([_pad_to(p[2].astype(jnp.bfloat16), (ff_pad, h_pad))
                      for p in layer_params])
    b2_s = jnp.stack([_pad_to(p[3].reshape(1, -1).astype(jnp.float32), (1, h_pad))
                      for p in layer_params])

    x2d = _pad_to(x.reshape(n, h).astype(jnp.float32), (n_pad, h_pad))

    grid = (n_pad // tile_n, num_layers, ff_pad // tile_ff)

    flops = 4 * n_pad * h_pad * ff_pad * num_layers          # two matmuls
    transcendentals = n_pad * ff_pad * num_layers             # tanh-GELU
    bytes_accessed = (x2d.size * 4 + w1_s.size * 2 + w2_s.size * 2
                      + b1_s.size * 4 + b2_s.size * 4 + n_pad * h_pad * 4)

    out = pl.pallas_call(
        _multiblock_kernel,
        out_shape=jax.ShapeDtypeStruct((n_pad, h_pad), jnp.float32),
        grid_spec=pltpu.PrefetchScalarGridSpec(
            num_scalar_prefetch=0,
            grid=grid,
            in_specs=[
                # Activation row tile: constant over (layer, ff) -> fetched once per i.
                pl.BlockSpec((tile_n, h_pad), lambda i, l, f: (i, 0)),
                # Streamed weight / bias tiles, indexed by (layer, ff tile).
                pl.BlockSpec((None, h_pad, tile_ff), lambda i, l, f: (l, 0, f)),
                pl.BlockSpec((None, 1, tile_ff), lambda i, l, f: (l, 0, f)),
                pl.BlockSpec((None, tile_ff, h_pad), lambda i, l, f: (l, f, 0)),
                pl.BlockSpec((None, 1, h_pad), lambda i, l, f: (l, 0, 0)),
            ],
            out_specs=pl.BlockSpec((tile_n, h_pad), lambda i, l, f: (i, 0)),
            scratch_shapes=[
                pltpu.VMEM((tile_n, h_pad), jnp.float32),   # resident activation
                pltpu.VMEM((tile_n, h_pad), jnp.float32),   # FF-reduction accumulator
            ],
        ),
        compiler_params=pltpu.CompilerParams(
            dimension_semantics=("parallel", "arbitrary", "arbitrary"),
            vmem_limit_bytes=48 * 1024 * 1024,
        ),
        cost_estimate=pl.CostEstimate(
            flops=flops,
            transcendentals=transcendentals,
            bytes_accessed=bytes_accessed,
        ),
    )(x2d, w1_s, b1_s, w2_s, b2_s)

    return out[:n, :h].reshape(b, s, h)


def make_decoder_layer(key, hidden, ffn):
    """Deterministic synthetic decoder-layer parameters (weights in bf16)."""
    k1, k2, k3, k4 = jax.random.split(key, 4)
    w1 = (jax.random.normal(k1, (hidden, ffn), dtype=jnp.float32)
          / jnp.sqrt(jnp.float32(hidden))).astype(jnp.bfloat16)
    b1 = jax.random.normal(k3, (1, ffn), dtype=jnp.float32) * 0.02
    w2 = (jax.random.normal(k2, (ffn, hidden), dtype=jnp.float32)
          / jnp.sqrt(jnp.float32(ffn))).astype(jnp.bfloat16)
    b2 = jax.random.normal(k4, (1, hidden), dtype=jnp.float32) * 0.02
    return (w1, b1, w2, b2)


def _reference_forward(x, layer_params):
    """Pure-JAX reference (same bf16 matmul operands, f32 residual path)."""
    b, s, h = x.shape
    hs = x.reshape(b * s, h).astype(jnp.float32)
    for (w1, b1, w2, b2) in layer_params:
        pre = jnp.dot(hs.astype(jnp.bfloat16), w1,
                      preferred_element_type=jnp.float32) + b1
        act = jax.nn.gelu(pre, approximate=True)
        y = jnp.dot(act.astype(jnp.bfloat16), w2,
                    preferred_element_type=jnp.float32) + b2
        hs = hs + y
    return hs.reshape(b, s, h)


if __name__ == "__main__":
    batch, seq, hidden, ffn, n_layers = 2, 8, 32, 64, 3

    key = jax.random.PRNGKey(0)
    kx, *layer_keys = jax.random.split(key, n_layers + 1)

    x = jax.random.normal(kx, (batch, seq, hidden), dtype=jnp.float32)
    layer_params = [make_decoder_layer(k, hidden, ffn) for k in layer_keys]

    fwd = jax.jit(wrapper_multiblock_forward)
    out = jax.block_until_ready(fwd(x, layer_params))

    ref = _reference_forward(x, layer_params)
    assert out.shape == (batch, seq, hidden)
    assert jnp.allclose(out, ref, atol=1e-2, rtol=1e-2), (
        float(jnp.max(jnp.abs(out - ref))))

    print("KERNEL_OK")
</pallas_src>

<mosaic_0001>
module attributes {stable_mosaic.version = 11 : i64} {
  func.func @_multiblock_kernel(%arg0: i32, %arg1: i32, %arg2: i32, %arg3: memref<16x128xf32, #tpu.memory_space<vmem>>, %arg4: memref<1x128x128xbf16, #tpu.memory_space<vmem>>, %arg5: memref<1x1x128xf32, #tpu.memory_space<vmem>>, %arg6: memref<1x128x128xbf16, #tpu.memory_space<vmem>>, %arg7: memref<1x1x128xf32, #tpu.memory_space<vmem>>, %arg8: memref<16x128xf32, #tpu.memory_space<vmem>>, %arg9: memref<16x128xf32, #tpu.memory_space<vmem>>, %arg10: memref<16x128xf32, #tpu.memory_space<vmem>>) attributes {dimension_semantics = [#tpu.dimension_semantics<parallel>, #tpu.dimension_semantics<arbitrary>, #tpu.dimension_semantics<arbitrary>], iteration_bounds = array<i64: 1, 3, 1>, scalar_prefetch = 0 : i64, scratch_operands = 2 : i64, tpu.core_type = #tpu.core_type<tc>, window_params = [{transform_indices = @transform_0, window_bounds = array<i64: 16, 128>}, {transform_indices = @transform_1, window_bounds = array<i64: 1, 128, 128>}, {transform_indices = @transform_2, window_bounds = array<i64: 1, 1, 128>}, {transform_indices = @transform_3, window_bounds = array<i64: 1, 128, 128>}, {transform_indices = @transform_4, window_bounds = array<i64: 1, 1, 128>}, {transform_indices = @transform_5, window_bounds = array<i64: 16, 128>}]} {
    %c0_i32 = arith.constant 0 : i32
    %0 = arith.cmpi eq, %arg1, %c0_i32 : i32
    %c0_i32_0 = arith.constant 0 : i32
    %1 = arith.cmpi eq, %arg2, %c0_i32_0 : i32
    %2 = arith.andi %0, %1 : i1
    %3 = arith.extui %2 : i1 to i32
    %c0_i32_1 = arith.constant 0 : i32
    %4 = arith.cmpi ne, %3, %c0_i32_1 : i32
    scf.if %4 {
      %c0_27 = arith.constant 0 : index
      %c0_28 = arith.constant 0 : index
      %45 = vector.load %arg3[%c0_27, %c0_28] : memref<16x128xf32, #tpu.memory_space<vmem>>, vector<16x128xf32>
      %c0_29 = arith.constant 0 : index
      %c0_30 = arith.constant 0 : index
      %46 = vector.load %arg9[%c0_29, %c0_30] : memref<16x128xf32, #tpu.memory_space<vmem>>, vector<16x128xf32>
      tpu.vector_store %arg9[%c0_29, %c0_30], %45 {strides = array<i32>} : memref<16x128xf32, #tpu.memory_space<vmem>>, vector<16x128xf32>,
    } else {
    }
    %c0_i32_2 = arith.constant 0 : i32
    %5 = arith.cmpi eq, %arg2, %c0_i32_2 : i32
    %6 = arith.extui %5 : i1 to i32
    %c0_i32_3 = arith.constant 0 : i32
    %7 = arith.cmpi ne, %6, %c0_i32_3 : i32
    scf.if %7 {
      %cst_27 = arith.constant 0.000000e+00 : f32
      %45 = vector.broadcast %cst_27 : f32 to vector<16x128xf32>
      %c0_28 = arith.constant 0 : index
      %c0_29 = arith.constant 0 : index
      %46 = vector.load %arg10[%c0_28, %c0_29] : memref<16x128xf32, #tpu.memory_space<vmem>>, vector<16x128xf32>
      tpu.vector_store %arg10[%c0_28, %c0_29], %45 {strides = array<i32>} : memref<16x128xf32, #tpu.memory_space<vmem>>, vector<16x128xf32>,
    } else {
    }
    %c0 = arith.constant 0 : index
    %c0_4 = arith.constant 0 : index
    %8 = vector.load %arg9[%c0, %c0_4] : memref<16x128xf32, #tpu.memory_space<vmem>>, vector<16x128xf32>
    %9 = arith.truncf %8 : vector<16x128xf32> to vector<16x128xbf16>
    %c0_5 = arith.constant 0 : index
    %c0_6 = arith.constant 0 : index
    %c0_7 = arith.constant 0 : index
    %10 = vector.load %arg4[%c0_5, %c0_6, %c0_7] : memref<1x128x128xbf16, #tpu.memory_space<vmem>>, vector<1x128x128xbf16>
    %11 = vector.shape_cast %10 : vector<1x128x128xbf16> to vector<128x128xbf16>
    %cst = arith.constant dense<0.000000e+00> : vector<16x128xf32>
    %12 = tpu.matmul %9, %11, %cst {dimension_numbers = #tpu.dot_dimension_numbers<[1], [0], [0], [1], [0, 0, 1, 1], [], []>} : vector<16x128xbf16>, vector<128x128xbf16>, vector<16x128xf32> -> vector<16x128xf32>
    %c0_8 = arith.constant 0 : index
    %c0_9 = arith.constant 0 : index
    %c0_10 = arith.constant 0 : index
    %13 = vector.load %arg5[%c0_8, %c0_9, %c0_10] : memref<1x1x128xf32, #tpu.memory_space<vmem>>, vector<1x1x128xf32>
    %14 = vector.shape_cast %13 : vector<1x1x128xf32> to vector<1x128xf32>
    %15 = vector.broadcast %14 : vector<1x128xf32> to vector<16x128xf32>
    %16 = arith.addf %12, %15 : vector<16x128xf32>
    %17 = arith.mulf %16, %16 : vector<16x128xf32>
    %18 = arith.mulf %16, %17 : vector<16x128xf32>
    %cst_11 = arith.constant 4.471500e-02 : f32
    %19 = vector.broadcast %cst_11 : f32 to vector<16x128xf32>
    %20 = arith.mulf %19, %18 : vector<16x128xf32>
    %21 = arith.addf %16, %20 : vector<16x128xf32>
    %cst_12 = arith.constant 0.797884583 : f32
    %22 = vector.broadcast %cst_12 : f32 to vector<16x128xf32>
    %23 = arith.mulf %22, %21 : vector<16x128xf32>
    %24 = math.tanh %23 : vector<16x128xf32>
    %cst_13 = arith.constant 1.000000e+00 : f32
    %25 = vector.broadcast %cst_13 : f32 to vector<16x128xf32>
    %26 = arith.addf %25, %24 : vector<16x128xf32>
    %cst_14 = arith.constant 5.000000e-01 : f32
    %27 = vector.broadcast %cst_14 : f32 to vector<16x128xf32>
    %28 = arith.mulf %27, %26 : vector<16x128xf32>
    %29 = arith.mulf %16, %28 : vector<16x128xf32>
    %c0_15 = arith.constant 0 : index
    %c0_16 = arith.constant 0 : index
    %30 = vector.load %arg10[%c0_15, %c0_16] : memref<16x128xf32, #tpu.memory_space<vmem>>, vector<16x128xf32>
    %31 = arith.truncf %29 : vector<16x128xf32> to vector<16x128xbf16>
    %c0_17 = arith.constant 0 : index
    %c0_18 = arith.constant 0 : index
    %c0_19 = arith.constant 0 : index
    %32 = vector.load %arg6[%c0_17, %c0_18, %c0_19] : memref<1x128x128xbf16, #tpu.memory_space<vmem>>, vector<1x128x128xbf16>
    %33 = vector.shape_cast %32 : vector<1x128x128xbf16> to vector<128x128xbf16>
    %cst_20 = arith.constant dense<0.000000e+00> : vector<16x128xf32>
    %34 = tpu.matmul %31, %33, %cst_20 {dimension_numbers = #tpu.dot_dimension_numbers<[1], [0], [0], [1], [0, 0, 1, 1], [], []>} : vector<16x128xbf16>, vector<128x128xbf16>, vector<16x128xf32> -> vector<16x128xf32>
    %35 = arith.addf %30, %34 : vector<16x128xf32>
    %c0_21 = arith.constant 0 : index
    %c0_22 = arith.constant 0 : index
    %36 = vector.load %arg10[%c0_21, %c0_22] : memref<16x128xf32, #tpu.memory_space<vmem>>, vector<16x128xf32>
    tpu.vector_store %arg10[%c0_21, %c0_22], %35 {strides = array<i32>} : memref<16x128xf32, #tpu.memory_space<vmem>>, vector<16x128xf32>,
    %c0_i32_23 = arith.constant 0 : i32
    %37 = arith.cmpi eq, %arg2, %c0_i32_23 : i32
    %38 = arith.extui %37 : i1 to i32
    %c0_i32_24 = arith.constant 0 : i32
    %39 = arith.cmpi ne, %38, %c0_i32_24 : i32
    scf.if %39 {
      %c0_27 = arith.constant 0 : index
      %c0_28 = arith.constant 0 : index
      %45 = vector.load %arg9[%c0_27, %c0_28] : memref<16x128xf32, #tpu.memory_space<vmem>>, vector<16x128xf32>
      %c0_29 = arith.constant 0 : index
      %c0_30 = arith.constant 0 : index
      %46 = vector.load %arg10[%c0_29, %c0_30] : memref<16x128xf32, #tpu.memory_space<vmem>>, vector<16x128xf32>
      %47 = arith.addf %45, %46 : vector<16x128xf32>
      %c0_31 = arith.constant 0 : index
      %c0_32 = arith.constant 0 : index
      %c0_33 = arith.constant 0 : index
      %48 = vector.load %arg7[%c0_31, %c0_32, %c0_33] : memref<1x1x128xf32, #tpu.memory_space<vmem>>, vector<1x1x128xf32>
      %49 = vector.shape_cast %48 : vector<1x1x128xf32> to vector<1x128xf32>
      %50 = vector.broadcast %49 : vector<1x128xf32> to vector<16x128xf32>
      %51 = arith.addf %47, %50 : vector<16x128xf32>
      %c0_34 = arith.constant 0 : index
      %c0_35 = arith.constant 0 : index
      %52 = vector.load %arg9[%c0_34, %c0_35] : memref<16x128xf32, #tpu.memory_space<vmem>>, vector<16x128xf32>
      tpu.vector_store %arg9[%c0_34, %c0_35], %51 {strides = array<i32>} : memref<16x128xf32, #tpu.memory_space<vmem>>, vector<16x128xf32>,
    } else {
    }
    %c2_i32 = arith.constant 2 : i32
    %40 = arith.cmpi eq, %arg1, %c2_i32 : i32
    %c0_i32_25 = arith.constant 0 : i32
    %41 = arith.cmpi eq, %arg2, %c0_i32_25 : i32
    %42 = arith.andi %40, %41 : i1
    %43 = arith.extui %42 : i1 to i32
    %c0_i32_26 = arith.constant 0 : i32
    %44 = arith.cmpi ne, %43, %c0_i32_26 : i32
    scf.if %44 {
      %c0_27 = arith.constant 0 : index
      %c0_28 = arith.constant 0 : index
      %45 = vector.load %arg9[%c0_27, %c0_28] : memref<16x128xf32, #tpu.memory_space<vmem>>, vector<16x128xf32>
      %c0_29 = arith.constant 0 : index
      %c0_30 = arith.constant 0 : index
      %46 = vector.load %arg8[%c0_29, %c0_30] : memref<16x128xf32, #tpu.memory_space<vmem>>, vector<16x128xf32>
      tpu.vector_store %arg8[%c0_29, %c0_30], %45 {strides = array<i32>} : memref<16x128xf32, #tpu.memory_space<vmem>>, vector<16x128xf32>,
    } else {
    }
    return
  }
  func.func @transform_0(%arg0: i32, %arg1: i32, %arg2: i32) -> (i32, i32) {
    %c0_i32 = arith.constant 0 : i32
    %c0_i32_0 = arith.constant 0 : i32
    return %arg0, %c0_i32 : i32, i32
  }
  func.func @transform_1(%arg0: i32, %arg1: i32, %arg2: i32) -> (i32, i32, i32) {
    %c0_i32 = arith.constant 0 : i32
    %c0_i32_0 = arith.constant 0 : i32
    return %arg1, %c0_i32, %arg2 : i32, i32, i32
  }
  func.func @transform_2(%arg0: i32, %arg1: i32, %arg2: i32) -> (i32, i32, i32) {
    %c0_i32 = arith.constant 0 : i32
    %c0_i32_0 = arith.constant 0 : i32
    return %arg1, %c0_i32, %arg2 : i32, i32, i32
  }
  func.func @transform_3(%arg0: i32, %arg1: i32, %arg2: i32) -> (i32, i32, i32) {
    %c0_i32 = arith.constant 0 : i32
    %c0_i32_0 = arith.constant 0 : i32
    return %arg1, %arg2, %c0_i32 : i32, i32, i32
  }
  func.func @transform_4(%arg0: i32, %arg1: i32, %arg2: i32) -> (i32, i32, i32) {
    %c0_i32 = arith.constant 0 : i32
    %c0_i32_0 = arith.constant 0 : i32
    %c0_i32_1 = arith.constant 0 : i32
    return %arg1, %c0_i32, %c0_i32_0 : i32, i32, i32
  }
  func.func @transform_5(%arg0: i32, %arg1: i32, %arg2: i32) -> (i32, i32) {
    %c0_i32 = arith.constant 0 : i32
    %c0_i32_0 = arith.constant 0 : i32
    return %arg0, %c0_i32 : i32, i32
  }
}

</mosaic_0001>

<llo_original>
// kernel: wrapper_multiblock_forward.1
$region0: #{wrapper_multiblock_forward.1}
  #allocation0 [shape = 'u32[]', space=smem, size = 0x4, offset = 0x4, fixed_abs, tag = 'smem constant byte address 0x4 - core index']
  #allocation1 [shape = 'u32[72,128]{1,0:T(1,128)}', space=vmem, size = 0x9000, scoped, tag = 'internal scratch']
  #allocation2 [shape = 'f32[16,128]{1,0:T(8,128)}', space=vmem, size = 0x2000, scoped, tag = 'scratch operand']
  #allocation3 [shape = 'f32[16,128]{1,0:T(8,128)}', space=vmem, size = 0x2000, scoped, tag = 'scratch operand']
  %s0 = inlined_call_operand.vmem [shape: f32[16,128], index: 0, kind: input, shape index: {}]
  %s1 = inlined_call_operand.vmem [shape: bf16[3,128,128], index: 1, kind: input, shape index: {}]
  %s2 = inlined_call_operand.vmem [shape: f32[3,1,128], index: 2, kind: input, shape index: {}]
  %s3 = inlined_call_operand.vmem [shape: bf16[3,128,128], index: 3, kind: input, shape index: {}]
  %s4 = inlined_call_operand.vmem [shape: f32[3,1,128], index: 4, kind: input, shape index: {}]
  %s5 = inlined_call_operand.vmem [shape: f32[16,128], index: 5, kind: output, shape index: {}]
  %s6 = sld [smem:[#allocation0]]
  $region69: #{wrapper_multiblock_forward.1} parent=0
    _
  %s8 = ssub.s32 1, %s6
  %s9 = scalar_select 0, %s8, %s6
  loop: start=0, step=1, limit=5
  $region2: #{wrapper_multiblock_forward.1} parent=0 // loop_pre_header
    _
  $region3: #{wrapper_multiblock_forward.1} parent=0 // loop_header
    %s11 = sphi 0, %s15
    %p12 = scmp.ge.s32.totalorder %s11, 5
    %s18 = sphi 0, %s37
    %s19 = sphi 0, %s33
    %s20 = sphi 0, %s29
    %s21 = sphi 0, %s18
    %s22 = sphi 0, %s19
    %s23 = sphi 0, %s20
    %s24 = sphi 0, %s21
    %s25 = sphi 0, %s22
    %s26 = sphi 0, %s23
    %s40 = sphi 0, %s42
    %s43 = sphi 0, %s40
    %s44 = sphi 0, %s43
    %s60 = sphi 0, %s44
    %s68 = sphi 0, %s70
    %s71 = sphi 0, %s68
    %s72 = sphi 0, %s71
    %s88 = sphi 0, %s72
    %s96 = sphi 0, %s98
    %s99 = sphi 0, %s96
    %s100 = sphi 0, %s99
    %s116 = sphi 0, %s100
    %s124 = sphi 0, %s126
    %s127 = sphi 0, %s124
    %s128 = sphi 0, %s127
    %s144 = sphi 0, %s128
    %s150 = sphi 0, %s152
    %s153 = sphi 0, %s150
    %s154 = sphi 0, %s153
    %s170 = sphi 0, %s154
    %s176 = sphi 0, %s178
    %s179 = sphi 0, %s176
    %s180 = sphi 0, %s179
    %s196 = sphi 0, %s180
  $region4: #{wrapper_multiblock_forward.1} parent=0 // loop_header_branch
    %14 = sbr.rel (%p12) target = $region8
  $region5: #{wrapper_multiblock_forward.1} parent=0 // loop_body
    %s16 = ssub.s32 %s11, 1
    %s17 = ssub.s32 %s11, 2
    %s27 = sadd.s32 1, %s20
    %p28 = scmp.ge.s32.totalorder %s27, 1
    %s29 = scalar_select %p28, 0, %s27
    %s30 = sadd.s32 1, %s19
    %s31 = scalar_select %p28, %s30, %s19
    %p32 = scmp.ge.s32.totalorder %s31, 3
    %s33 = scalar_select %p32, 0, %s31
    %s34 = sadd.s32 1, %s18
    %s35 = scalar_select %p32, %s34, %s18
    %p36 = scmp.ge.s32.totalorder %s35, 1
    %s37 = scalar_select %p36, 0, %s35
    %s38 = ssub.s32 %s18, %s37
    %p39 = scmp.eq.s32.totalorder %s38, 0
    %s41 = sadd.s32 %s40, 1
    %s42 = scalar_select %p39, %s40, %s41
    %p45 = pneg %p39
    %p46 = scmp.eq.s32.totalorder %s11, 2
    %p47 = por %p45, %p46
    %p48 = scmp.ne.s32.totalorder %s40, %s43
    %p49 = scmp.eq.s32.totalorder %s11, 0
    %p50 = por %p48, %p49
    %p51 = scmp.ne.s32.totalorder %s40, %s43
    %p52 = scmp.eq.s32.totalorder %s16, 2
    %p53 = por %p51, %p52
    %p54 = scmp.ne.s32.totalorder %s43, %s44
    %p55 = scmp.eq.s32.totalorder %s16, 0
    %p56 = por %p54, %p55
    %p57 = scmp.ne.s32.totalorder %s43, %s44
    %p58 = scmp.eq.s32.totalorder %s17, 2
    %p59 = por %p57, %p58
    %p61 = scmp.ne.s32.totalorder %s44, %s60
    %p62 = scmp.eq.s32.totalorder %s17, 0
    %p63 = por %p61, %p62
    %s64 = ssub.s32 %s19, %s33
    %s65 = ssub.s32 %s20, %s29
    %s66 = sor.u32 %s64, %s65
    %p67 = scmp.eq.s32.totalorder %s66, 0
    %s69 = sadd.s32 %s68, 1
    %s70 = scalar_select %p67, %s68, %s69
    %p73 = pneg %p67
    %p74 = scmp.eq.s32.totalorder %s11, 2
    %p75 = por %p73, %p74
    %p76 = scmp.ne.s32.totalorder %s68, %s71
    %p77 = scmp.eq.s32.totalorder %s11, 0
    %p78 = por %p76, %p77
    %p79 = scmp.ne.s32.totalorder %s68, %s71
    %p80 = scmp.eq.s32.totalorder %s16, 2
    %p81 = por %p79, %p80
    %p82 = scmp.ne.s32.totalorder %s71, %s72
    %p83 = scmp.eq.s32.totalorder %s16, 0
    %p84 = por %p82, %p83
    %p85 = scmp.ne.s32.totalorder %s71, %s72
    %p86 = scmp.eq.s32.totalorder %s17, 2
    %p87 = por %p85, %p86
    %p89 = scmp.ne.s32.totalorder %s72, %s88
    %p90 = scmp.eq.s32.totalorder %s17, 0
    %p91 = por %p89, %p90
    %s92 = ssub.s32 %s19, %s33
    %s93 = ssub.s32 %s20, %s29
    %s94 = sor.u32 %s92, %s93
    %p95 = scmp.eq.s32.totalorder %s94, 0
    %s97 = sadd.s32 %s96, 1
    %s98 = scalar_select %p95, %s96, %s97
    %p101 = pneg %p95
    %p102 = scmp.eq.s32.totalorder %s11, 2
    %p103 = por %p101, %p102
    %p104 = scmp.ne.s32.totalorder %s96, %s99
    %p105 = scmp.eq.s32.totalorder %s11, 0
    %p106 = por %p104, %p105
    %p107 = scmp.ne.s32.totalorder %s96, %s99
    %p108 = scmp.eq.s32.totalorder %s16, 2
    %p109 = por %p107, %p108
    %p110 = scmp.ne.s32.totalorder %s99, %s100
    %p111 = scmp.eq.s32.totalorder %s16, 0
    %p112 = por %p110, %p111
    %p113 = scmp.ne.s32.totalorder %s99, %s100
    %p114 = scmp.eq.s32.totalorder %s17, 2
    %p115 = por %p113, %p114
    %p117 = scmp.ne.s32.totalorder %s100, %s116
    %p118 = scmp.eq.s32.totalorder %s17, 0
    %p119 = por %p117, %p118
    %s120 = ssub.s32 %s19, %s33
    %s121 = ssub.s32 %s20, %s29
    %s122 = sor.u32 %s120, %s121
    %p123 = scmp.eq.s32.totalorder %s122, 0
    %s125 = sadd.s32 %s124, 1
    %s126 = scalar_select %p123, %s124, %s125
    %p129 = pneg %p123
    %p130 = scmp.eq.s32.totalorder %s11, 2
    %p131 = por %p129, %p130
    %p132 = scmp.ne.s32.totalorder %s124, %s127
    %p133 = scmp.eq.s32.totalorder %s11, 0
    %p134 = por %p132, %p133
    %p135 = scmp.ne.s32.totalorder %s124, %s127
    %p136 = scmp.eq.s32.totalorder %s16, 2
    %p137 = por %p135, %p136
    %p138 = scmp.ne.s32.totalorder %s127, %s128
    %p139 = scmp.eq.s32.totalorder %s16, 0
    %p140 = por %p138, %p139
    %p141 = scmp.ne.s32.totalorder %s127, %s128
    %p142 = scmp.eq.s32.totalorder %s17, 2
    %p143 = por %p141, %p142
    %p145 = scmp.ne.s32.totalorder %s128, %s144
    %p146 = scmp.eq.s32.totalorder %s17, 0
    %p147 = por %p145, %p146
    %s148 = ssub.s32 %s19, %s33
    %p149 = scmp.eq.s32.totalorder %s148, 0
    %s151 = sadd.s32 %s150, 1
    %s152 = scalar_select %p149, %s150, %s151
    %p155 = pneg %p149
    %p156 = scmp.eq.s32.totalorder %s11, 2
    %p157 = por %p155, %p156
    %p158 = scmp.ne.s32.totalorder %s150, %s153
    %p159 = scmp.eq.s32.totalorder %s11, 0
    %p160 = por %p158, %p159
    %p161 = scmp.ne.s32.totalorder %s150, %s153
    %p162 = scmp.eq.s32.totalorder %s16, 2
    %p163 = por %p161, %p162
    %p164 = scmp.ne.s32.totalorder %s153, %s154
    %p165 = scmp.eq.s32.totalorder %s16, 0
    %p166 = por %p164, %p165
    %p167 = scmp.ne.s32.totalorder %s153, %s154
    %p168 = scmp.eq.s32.totalorder %s17, 2
    %p169 = por %p167, %p168
    %p171 = scmp.ne.s32.totalorder %s154, %s170
    %p172 = scmp.eq.s32.totalorder %s17, 0
    %p173 = por %p171, %p172
    %s174 = ssub.s32 %s18, %s37
    %p175 = scmp.eq.s32.totalorder %s174, 0
    %s177 = sadd.s32 %s176, 1
    %s178 = scalar_select %p175, %s176, %s177
    %p181 = pneg %p175
    %p182 = scmp.eq.s32.totalorder %s11, 2
    %p183 = por %p181, %p182
    %p184 = scmp.ne.s32.totalorder %s176, %s179
    %p185 = scmp.eq.s32.totalorder %s11, 0
    %p186 = por %p184, %p185
    %p187 = scmp.ne.s32.totalorder %s176, %s179
    %p188 = scmp.eq.s32.totalorder %s16, 2
    %p189 = por %p187, %p188
    %p190 = scmp.ne.s32.totalorder %s179, %s180
    %p191 = scmp.eq.s32.totalorder %s16, 0
    %p192 = por %p190, %p191
    %p193 = scmp.ne.s32.totalorder %s179, %s180
    %p194 = scmp.eq.s32.totalorder %s17, 2
    %p195 = por %p193, %p194
    %p197 = scmp.ne.s32.totalorder %s180, %s196
    %p198 = scmp.eq.s32.totalorder %s17, 0
    %p199 = por %p197, %p198
    %p200 = scmp.le.s32.totalorder 1, %s11
    %p201 = scmp.lt.s32.totalorder %s11, 4
    %p202 = pnand %p200, %p201
    %p203 = pneg %p202
    // Predicated region
    $region9: #{wrapper_multiblock_forward.1} parent=5 // pred_check
      _
    $region10: #{wrapper_multiblock_forward.1} parent=5 // pred_check_branch
      %205 = sbr.rel (%p202) target = $region12
    $region11: #{wrapper_multiblock_forward.1} parent=5 // pred_region
      %s206 = ssub.s32 %s11, 1
      // Predicated region
      $region13: #{wrapper_multiblock_forward.1} parent=11 // pred_check
        %p207 = pneg %p56
      $region14: #{wrapper_multiblock_forward.1} parent=11 // pred_check_branch
        %209 = sbr.rel (%p207) target = $region16
      $region15: #{wrapper_multiblock_forward.1} parent=11 // pred_region
        %s210 = smul.u32 2, %s21
        %p211 = scmp.lt.s32.totalorder %s210, 1
        %s212 = scalar_select %p211, %s210, 1
        %s213 = smul.addr %s212, 8
        %s214 = scalar_lea.vmem %s0, %s213
        %s215 = smul.u32 2, %s21
      $region16: #{wrapper_multiblock_forward.1} parent=11 // pred_fallthru
        _
    $region12: #{wrapper_multiblock_forward.1} parent=5 // pred_fallthru
      _
    %p216 = scmp.lt.s32.totalorder %s11, 3
    // Predicated region
    $region17: #{wrapper_multiblock_forward.1} parent=5 // pred_check
      %p217 = pneg %p216
    $region18: #{wrapper_multiblock_forward.1} parent=5 // pred_check_branch
      %219 = sbr.rel (%p217) target = $region20
    $region19: #{wrapper_multiblock_forward.1} parent=5 // pred_region
      // Predicated region
      $region21: #{wrapper_multiblock_forward.1} parent=19 // pred_check
        %p220 = pneg %p78
      $region22: #{wrapper_multiblock_forward.1} parent=19 // pred_check_branch
        %222 = sbr.rel (%p220) target = $region24
      $region23: #{wrapper_multiblock_forward.1} parent=19 // pred_region
        %p223 = scmp.lt.s32.totalorder %s19, 2
        %s224 = scalar_select %p223, %s19, 2
        %p225 = scmp.lt.s32.totalorder %s20, 0
        %s226 = scalar_select %p225, %s20, 0
        %s227 = smul.addr %s224, 16
        %s228 = sadd.s32 %s226, %s227
        %s229 = smul.addr %s228, 4
        %s230 = scalar_lea.vmem %s1, %s229
      $region24: #{wrapper_multiblock_forward.1} parent=19 // pred_fallthru
        _
      // Predicated region
      $region25: #{wrapper_multiblock_forward.1} parent=19 // pred_check
        %p231 = pneg %p106
      $region26: #{wrapper_multiblock_forward.1} parent=19 // pred_check_branch
        %233 = sbr.rel (%p231) target = $region28
      $region27: #{wrapper_multiblock_forward.1} parent=19 // pred_region
        %p234 = scmp.lt.s32.totalorder %s19, 2
        %s235 = scalar_select %p234, %s19, 2
        %p236 = scmp.lt.s32.totalorder %s20, 0
        %s237 = scalar_select %p236, %s20, 0
        %s238 = sadd.s32 %s237, %s235
        %s239 = scalar_lea.vmem %s2, %s238
      $region28: #{wrapper_multiblock_forward.1} parent=19 // pred_fallthru
        _
      // Predicated region
      $region29: #{wrapper_multiblock_forward.1} parent=19 // pred_check
        %p240 = pneg %p134
      $region30: #{wrapper_multiblock_forward.1} parent=19 // pred_check_branch
        %242 = sbr.rel (%p240) target = $region32
      $region31: #{wrapper_multiblock_forward.1} parent=19 // pred_region
        %s243 = smul.u32 16, %s20
        %p244 = scmp.lt.s32.totalorder %s19, 2
        %s245 = scalar_select %p244, %s19, 2
        %p246 = scmp.lt.s32.totalorder %s243, 15
        %s247 = scalar_select %p246, %s243, 15
        %s248 = smul.addr %s245, 16
        %s249 = sadd.s32 %s247, %s248
        %s250 = smul.addr %s249, 4
        %s251 = scalar_lea.vmem %s3, %s250
        %s252 = smul.u32 16, %s20
      $region32: #{wrapper_multiblock_forward.1} parent=19 // pred_fallthru
        _
      // Predicated region
      $region33: #{wrapper_multiblock_forward.1} parent=19 // pred_check
        %p253 = pneg %p160
      $region34: #{wrapper_multiblock_forward.1} parent=19 // pred_check_branch
        %255 = sbr.rel (%p253) target = $region36
      $region35: #{wrapper_multiblock_forward.1} parent=19 // pred_region
        %p256 = scmp.lt.s32.totalorder %s19, 2
        %s257 = scalar_select %p256, %s19, 2
        %s258 = scalar_lea.vmem %s4, %s257
      $region36: #{wrapper_multiblock_forward.1} parent=19 // pred_fallthru
        _
    $region20: #{wrapper_multiblock_forward.1} parent=5 // pred_fallthru
      _
    %p259 = scmp.le.s32.totalorder 1, %s11
    %p260 = scmp.lt.s32.totalorder %s11, 4
    %p261 = pnand %p259, %p260
    %p262 = pneg %p261
    // Predicated region
    $region37: #{wrapper_multiblock_forward.1} parent=5 // pred_check
      _
    $region38: #{wrapper_multiblock_forward.1} parent=5 // pred_check_branch
      %264 = sbr.rel (%p261) target = $region40
    $region39: #{wrapper_multiblock_forward.1} parent=5 // pred_region
      %s265 = ssub.s32 %s11, 1
      %s266 = smul.u32 2, %s21
      %p267 = scmp.lt.s32.totalorder %s266, 1
      %s268 = scalar_select %p267, %s266, 1
      %s269 = smul.addr %s268, 8
      %s270 = scalar_lea.vmem %s0, %s269
      %p271 = pneg %p56
      %p272 = pneg %p53
      %p273 = scmp.lt.s32.totalorder %s22, 2
      %s274 = scalar_select %p273, %s22, 2
      %p275 = scmp.lt.s32.totalorder %s23, 0
      %s276 = scalar_select %p275, %s23, 0
      %s277 = smul.addr %s274, 16
      %s278 = sadd.s32 %s276, %s277
      %s279 = smul.addr %s278, 4
      %s280 = scalar_lea.vmem %s1, %s279
      %p281 = pneg %p84
      %p282 = pneg %p81
      %p283 = scmp.lt.s32.totalorder %s22, 2
      %s284 = scalar_select %p283, %s22, 2
      %p285 = scmp.lt.s32.totalorder %s23, 0
      %s286 = scalar_select %p285, %s23, 0
      %s287 = sadd.s32 %s286, %s284
      %s288 = scalar_lea.vmem %s2, %s287
      %p289 = pneg %p112
      %p290 = pneg %p109
      %s291 = smul.u32 16, %s23
      %p292 = scmp.lt.s32.totalorder %s22, 2
      %s293 = scalar_select %p292, %s22, 2
      %p294 = scmp.lt.s32.totalorder %s291, 15
      %s295 = scalar_select %p294, %s291, 15
      %s296 = smul.addr %s293, 16
      %s297 = sadd.s32 %s295, %s296
      %s298 = smul.addr %s297, 4
      %s299 = scalar_lea.vmem %s3, %s298
      %p300 = pneg %p140
      %p301 = pneg %p137
      %p302 = scmp.lt.s32.totalorder %s22, 2
      %s303 = scalar_select %p302, %s22, 2
      %s304 = scalar_lea.vmem %s4, %s303
      %p305 = pneg %p166
      %p306 = pneg %p163
      %p307 = pneg %p192
      %p308 = pneg %p189
      %s309 = smul.u32 2, %s21
      %p310 = scmp.lt.s32.totalorder %s309, 1
      %s311 = scalar_select %p310, %s309, 1
      %s312 = smul.addr %s311, 8
      %s313 = scalar_lea.vmem %s5, %s312
      %s314 = smul.u32 2, %s21
      %p315 = scmp.lt.s32.totalorder %s314, 1
      %s316 = scalar_select %p315, %s314, 1
      %s317 = smul.addr %s316, 8
      %s318 = scalar_lea.vmem %s0, %s317
      %s319 = smul.u32 2, %s21
      %p320 = scmp.lt.s32.totalorder %s22, 2
      %s321 = scalar_select %p320, %s22, 2
      %p322 = scmp.lt.s32.totalorder %s23, 0
      %s323 = scalar_select %p322, %s23, 0
      %s324 = smul.addr %s321, 16
      %s325 = sadd.s32 %s323, %s324
      %s326 = smul.addr %s325, 4
      %s327 = scalar_lea.vmem %s1, %s326
      %p328 = scmp.lt.s32.totalorder %s22, 2
      %s329 = scalar_select %p328, %s22, 2
      %p330 = scmp.lt.s32.totalorder %s23, 0
      %s331 = scalar_select %p330, %s23, 0
      %s332 = sadd.s32 %s331, %s329
      %s333 = scalar_lea.vmem %s2, %s332
      %s334 = smul.u32 16, %s23
      %p335 = scmp.lt.s32.totalorder %s22, 2
      %s336 = scalar_select %p335, %s22, 2
      %p337 = scmp.lt.s32.totalorder %s334, 15
      %s338 = scalar_select %p337, %s334, 15
      %s339 = smul.addr %s336, 16
      %s340 = sadd.s32 %s338, %s339
      %s341 = smul.addr %s340, 4
      %s342 = scalar_lea.vmem %s3, %s341
      %s343 = smul.u32 16, %s23
      %p344 = scmp.lt.s32.totalorder %s22, 2
      %s345 = scalar_select %p344, %s22, 2
      %s346 = scalar_lea.vmem %s4, %s345
      %s347 = smul.u32 2, %s21
      %p348 = scmp.lt.s32.totalorder %s347, 1
      %s349 = scalar_select %p348, %s347, 1
      %s350 = smul.addr %s349, 8
      %s351 = scalar_lea.vmem %s5, %s350
      %s352 = smul.u32 2, %s21
      %p353 = scmp.eq.s32.totalorder %s22, 0
      %p354 = scmp.eq.s32.totalorder %s23, 0
      %p355 = pnand %p353, %p354
      %p356 = pneg %p355
      // Predicated region
      $region41: #{wrapper_multiblock_forward.1} parent=39 // pred_check
        _
      $region42: #{wrapper_multiblock_forward.1} parent=39 // pred_check_branch
        %358 = sbr.rel (%p355) target = $region44
      $region43: #{wrapper_multiblock_forward.1} parent=39 // pred_region
        %v359 = vld [vmem:[%s318] sm:$0xff]
        %v360 = vld [vmem:[%s318 + $0x8] sm:$0xff]
        %361 = vst [vmem:[#allocation2] sm:$0xff] %v359
        %362 = vst [vmem:[#allocation2 + $0x8] sm:$0xff] %v360
      $region44: #{wrapper_multiblock_forward.1} parent=39 // pred_fallthru
        _
      // Predicated region
      $region45: #{wrapper_multiblock_forward.1} parent=39 // pred_check
        %p363 = pneg %p354
      $region46: #{wrapper_multiblock_forward.1} parent=39 // pred_check_branch
        %365 = sbr.rel (%p363) target = $region48
      $region47: #{wrapper_multiblock_forward.1} parent=39 // pred_region
        %366 = vst [vmem:[#allocation3] sm:$0xff] 0.0
        %367 = vst [vmem:[#allocation3 + $0x8] sm:$0xff] 0.0
      $region48: #{wrapper_multiblock_forward.1} parent=39 // pred_fallthru
        _
      %v368 = vld [vmem:[#allocation2] sm:$0xff]
      %v369 = vld [vmem:[#allocation2 + $0x8] sm:$0xff]
      %v370 = vpack.c.bf16 %v369, %v368
      %v371 = vld [vmem:[%s327] sm:$0xf]
      %v372 = vld [vmem:[%s327 + $0x4] sm:$0xf]
      %v373 = vld [vmem:[%s327 + $0x8] sm:$0xf]
      %v374 = vld [vmem:[%s327 + $0xc] sm:$0xf]
      %v375 = vld [vmem:[%s327 + $0x10] sm:$0xf]
      %v376 = vld [vmem:[%s327 + $0x14] sm:$0xf]
      %v377 = vld [vmem:[%s327 + $0x18] sm:$0xf]
      %v378 = vld [vmem:[%s327 + $0x1c] sm:$0xf]
      %v379 = vld [vmem:[%s327 + $0x20] sm:$0xf]
      %v380 = vld [vmem:[%s327 + $0x24] sm:$0xf]
      %v381 = vld [vmem:[%s327 + $0x28] sm:$0xf]
      %v382 = vld [vmem:[%s327 + $0x2c] sm:$0xf]
      %v383 = vld [vmem:[%s327 + $0x30] sm:$0xf]
      %v384 = vld [vmem:[%s327 + $0x34] sm:$0xf]
      %v385 = vld [vmem:[%s327 + $0x38] sm:$0xf]
      %v386 = vld [vmem:[%s327 + $0x3c] sm:$0xf]
      %v387 = vld [vmem:[%s333] sm:$0x1]
      %v389 = vperm.slane %v387, 0
      %v407 = vunpack.c.l.b16 %v371
      %v408 = vunpack.c.l.b16 %v372
      %v409 = vunpack.c.l.b16 %v373
      %v410 = vunpack.c.l.b16 %v374
      %v411 = vunpack.c.l.b16 %v375
      %v412 = vunpack.c.l.b16 %v376
      %v413 = vunpack.c.l.b16 %v377
      %v414 = vunpack.c.l.b16 %v378
      %v415 = vunpack.c.l.b16 %v379
      %v416 = vunpack.c.l.b16 %v380
      %v417 = vunpack.c.l.b16 %v381
      %v418 = vunpack.c.l.b16 %v382
      %v419 = vunpack.c.l.b16 %v383
      %v420 = vunpack.c.l.b16 %v384
      %v421 = vunpack.c.l.b16 %v385
      %v422 = vunpack.c.l.b16 %v386
      %v423 = vpack.c.b16 %v408, %v407
      %v424 = vpack.c.b16 %v410, %v409
      %v425 = vpack.c.b16 %v412, %v411
      %v426 = vpack.c.b16 %v414, %v413
      %v427 = vpack.c.b16 %v416, %v415
      %v428 = vpack.c.b16 %v418, %v417
      %v429 = vpack.c.b16 %v420, %v419
      %v430 = vpack.c.b16 %v422, %v421
      %439 = vmatpush.bf16.msra.mxu0 %v430
      %440 = vmatpush.bf16.msra.mxu0 %v429
      %441 = vmatpush.bf16.msra.mxu0 %v428
      %442 = vmatpush.bf16.msra.mxu0 %v427
      %443 = vmatpush.bf16.msra.mxu0 %v426
      %444 = vmatpush.bf16.msra.mxu0 %v425
      %445 = vmatpush.bf16.msra.mxu0 %v424
      %446 = vmatpush.bf16.msra.mxu0 %v423
      %447 = vmatmul.bf16.gmra.mxu0 %v370
      %v448 = vpop.f32.mrf.mxu0
      %v449 = vadd.f32 %v389, %v448
      %v450 = vpop.f32.mrf.mxu0
      %v451 = vadd.f32 %v389, %v450
      %452 = vdwg.mxu0
      %v453 = vmul.f32 %v449, %v449
      %v454 = vmul.f32 %v451, %v451
      %v455 = vmul.f32 %v449, %v453
      %v456 = vmul.f32 %v451, %v454
      %v457 = vmul.f32 %v455, 0.044715
      %v458 = vmul.f32 %v456, 0.044715
      %v459 = vadd.f32 %v449, %v457
      %v460 = vadd.f32 %v451, %v458
      %v461 = vmul.f32 %v459, 0.7978846
      %v462 = vmul.f32 %v460, 0.7978846
      %v463 = vtanh.pop %v461
      %v464 = vtanh.pop %v462
      %v465 = vadd.f32 %v463, 1.0
      %v466 = vadd.f32 %v464, 1.0
      %v467 = vmul.f32 %v465, 0.5
      %v468 = vmul.f32 %v466, 0.5
      %v469 = vmul.f32 %v449, %v467
      %v470 = vmul.f32 %v451, %v468
      %v471 = vld [vmem:[#allocation3] sm:$0xff]
      %v472 = vld [vmem:[#allocation3 + $0x8] sm:$0xff]
      %v473 = vpack.c.bf16 %v470, %v469
      %v474 = vld [vmem:[%s342] sm:$0xf]
      %v475 = vld [vmem:[%s342 + $0x4] sm:$0xf]
      %v476 = vld [vmem:[%s342 + $0x8] sm:$0xf]
      %v477 = vld [vmem:[%s342 + $0xc] sm:$0xf]
      %v478 = vld [vmem:[%s342 + $0x10] sm:$0xf]
      %v479 = vld [vmem:[%s342 + $0x14] sm:$0xf]
      %v480 = vld [vmem:[%s342 + $0x18] sm:$0xf]
      %v481 = vld [vmem:[%s342 + $0x1c] sm:$0xf]
      %v482 = vld [vmem:[%s342 + $0x20] sm:$0xf]
      %v483 = vld [vmem:[%s342 + $0x24] sm:$0xf]
      %v484 = vld [vmem:[%s342 + $0x28] sm:$0xf]
      %v485 = vld [vmem:[%s342 + $0x2c] sm:$0xf]
      %v486 = vld [vmem:[%s342 + $0x30] sm:$0xf]
      %v487 = vld [vmem:[%s342 + $0x34] sm:$0xf]
      %v488 = vld [vmem:[%s342 + $0x38] sm:$0xf]
      %v489 = vld [vmem:[%s342 + $0x3c] sm:$0xf]
      %v506 = vunpack.c.l.b16 %v474
      %v507 = vunpack.c.l.b16 %v475
      %v508 = vunpack.c.l.b16 %v476
      %v509 = vunpack.c.l.b16 %v477
      %v510 = vunpack.c.l.b16 %v478
      %v511 = vunpack.c.l.b16 %v479
      %v512 = vunpack.c.l.b16 %v480
      %v513 = vunpack.c.l.b16 %v481
      %v514 = vunpack.c.l.b16 %v482
      %v515 = vunpack.c.l.b16 %v483
      %v516 = vunpack.c.l.b16 %v484
      %v517 = vunpack.c.l.b16 %v485
      %v518 = vunpack.c.l.b16 %v486
      %v519 = vunpack.c.l.b16 %v487
      %v520 = vunpack.c.l.b16 %v488
      %v521 = vunpack.c.l.b16 %v489
      %v522 = vpack.c.b16 %v507, %v506
      %v523 = vpack.c.b16 %v509, %v508
      %v524 = vpack.c.b16 %v511, %v510
      %v525 = vpack.c.b16 %v513, %v512
      %v526 = vpack.c.b16 %v515, %v514
      %v527 = vpack.c.b16 %v517, %v516
      %v528 = vpack.c.b16 %v519, %v518
      %v529 = vpack.c.b16 %v521, %v520
      %538 = vmatpush.bf16.msra.mxu0 %v529
      %539 = vmatpush.bf16.msra.mxu0 %v528
      %540 = vmatpush.bf16.msra.mxu0 %v527
      %541 = vmatpush.bf16.msra.mxu0 %v526
      %542 = vmatpush.bf16.msra.mxu0 %v525
      %543 = vmatpush.bf16.msra.mxu0 %v524
      %544 = vmatpush.bf16.msra.mxu0 %v523
      %545 = vmatpush.bf16.msra.mxu0 %v522
      %546 = vmatmul.bf16.gmra.mxu0 %v473
      %v547 = vpop.f32.mrf.mxu0
      %v548 = vadd.f32 0.0, %v547
      %v549 = vpop.f32.mrf.mxu0
      %v550 = vadd.f32 0.0, %v549
      %551 = vdwg.mxu0
      %v552 = vadd.f32 %v471, %v548
      %v553 = vadd.f32 %v472, %v550
      %554 = vst [vmem:[#allocation3] sm:$0xff] %v552
      %555 = vst [vmem:[#allocation3 + $0x8] sm:$0xff] %v553
      // Predicated region
      $region49: #{wrapper_multiblock_forward.1} parent=39 // pred_check
        %p556 = pneg %p354
      $region50: #{wrapper_multiblock_forward.1} parent=39 // pred_check_branch
        %558 = sbr.rel (%p556) target = $region52
      $region51: #{wrapper_multiblock_forward.1} parent=39 // pred_region
        %v559 = vld [vmem:[#allocation2] sm:$0xff]
        %v560 = vld [vmem:[#allocation2 + $0x8] sm:$0xff]
        %v561 = vld [vmem:[#allocation3] sm:$0xff]
        %v562 = vld [vmem:[#allocation3 + $0x8] sm:$0xff]
        %v563 = vadd.f32 %v559, %v561
        %v564 = vadd.f32 %v560, %v562
        %v565 = vld [vmem:[%s346] sm:$0x1]
        %v567 = vperm.slane %v565, 0
        %v569 = vadd.f32 %v563, %v567
        %v570 = vadd.f32 %v564, %v567
        %571 = vst [vmem:[#allocation2] sm:$0xff] %v569
        %572 = vst [vmem:[#allocation2 + $0x8] sm:$0xff] %v570
      $region52: #{wrapper_multiblock_forward.1} parent=39 // pred_fallthru
        _
      %p573 = scmp.eq.s32.totalorder %s22, 2
      %p574 = pnand %p573, %p354
      %p575 = pneg %p574
      // Predicated region
      $region53: #{wrapper_multiblock_forward.1} parent=39 // pred_check
        _
      $region54: #{wrapper_multiblock_forward.1} parent=39 // pred_check_branch
        %577 = sbr.rel (%p574) target = $region56
      $region55: #{wrapper_multiblock_forward.1} parent=39 // pred_region
        %v578 = vld [vmem:[#allocation2] sm:$0xff]
        %v579 = vld [vmem:[#allocation2 + $0x8] sm:$0xff]
        %580 = vst [vmem:[%s351] sm:$0xff] %v578
        %581 = vst [vmem:[%s351 + $0x8] sm:$0xff] %v579
      $region56: #{wrapper_multiblock_forward.1} parent=39 // pred_fallthru
        _
      %s582 = smul.u32 2, %s21
      %p583 = scmp.lt.s32.totalorder %s582, 1
      %s584 = scalar_select %p583, %s582, 1
      %s585 = smul.addr %s584, 8
      %s586 = scalar_lea.vmem %s5, %s585
      // Predicated region
      $region57: #{wrapper_multiblock_forward.1} parent=39 // pred_check
        %p587 = pneg %p189
      $region58: #{wrapper_multiblock_forward.1} parent=39 // pred_check_branch
        %589 = sbr.rel (%p587) target = $region60
      $region59: #{wrapper_multiblock_forward.1} parent=39 // pred_region
        %s590 = smul.u32 2, %s21
      $region60: #{wrapper_multiblock_forward.1} parent=39 // pred_fallthru
        _
      // Predicated region
      $region61: #{wrapper_multiblock_forward.1} parent=39 // pred_check
        %p591 = pneg %p189
      $region62: #{wrapper_multiblock_forward.1} parent=39 // pred_check_branch
        %593 = sbr.rel (%p591) target = $region64
      $region63: #{wrapper_multiblock_forward.1} parent=39 // pred_region
        %s594 = smul.u32 2, %s21
        %p595 = scmp.lt.s32.totalorder %s594, 1
        %s596 = scalar_select %p595, %s594, 1
        %s597 = smul.addr %s596, 8
        %s598 = scalar_lea.vmem %s5, %s597
      $region64: #{wrapper_multiblock_forward.1} parent=39 // pred_fallthru
        _
    $region40: #{wrapper_multiblock_forward.1} parent=5 // pred_fallthru
      _
    %p599 = scmp.le.s32.totalorder 2, %s11
    // Predicated region
    $region65: #{wrapper_multiblock_forward.1} parent=5 // pred_check
      %p600 = pneg %p599
    $region66: #{wrapper_multiblock_forward.1} parent=5 // pred_check_branch
      %602 = sbr.rel (%p600) target = $region68
    $region67: #{wrapper_multiblock_forward.1} parent=5 // pred_region
      %s603 = ssub.s32 %s11, 2
    $region68: #{wrapper_multiblock_forward.1} parent=5 // pred_fallthru
      _
  $region6: #{wrapper_multiblock_forward.1} parent=0 // loop_footer
    %s15 = sadd.s32 1, %s11
  $region7: #{wrapper_multiblock_forward.1} parent=0 // loop_footer_branch
    %10 = sbr.rel target = $region3
  $region8: #{wrapper_multiblock_forward.1} parent=0 // loop_exit
    _

</llo_original>
